<compile_context>
chip_gen: v7x
topology: tpu7x:2x2x1
jax: 0.10.0
libtpu: 0.0.40
codegen_flags: <defaults>
</compile_context>

<pallas_src>
import jax
import jax.numpy as jnp
from jax.experimental import pallas as pl
from jax.experimental.pallas import tpu as pltpu


_VMEM_BUDGET = 24 * 1024 * 1024   # target per-step working set (all gens)
_VMEM_LIMIT = 32 * 1024 * 1024    # vmem_limit_bytes handed to Mosaic


def _cdiv(a: int, b: int) -> int:
    return (a + b - 1) // b


def _round_up(x: int, m: int) -> int:
    return _cdiv(x, m) * m


def _balanced_tiles(total: int, n_tiles: int, align: int):
    """Split `total` into ~n_tiles equal, `align`-aligned tiles.

    Returns (tile, n_tiles, padded_total) with padded_total = n_tiles * tile,
    minimising the zero padding (padded_total - total < tile + align).
    """
    n = max(1, n_tiles)
    tile = max(align, _round_up(_cdiv(total, n), align))
    n = _cdiv(total, tile)
    return tile, n, n * tile


# ----------------------------------------------------------------------------
# Kernels
# ----------------------------------------------------------------------------
def _wide_kernel_whole_k(x_ref, w_ref, b_ref, o_ref):
    # E fits one K tile: one MXU dot, bias add on the VPU, direct store.
    # W/bias index_maps are constant -> fetched once, resident in VMEM.
    o_ref[...] = (
        jnp.dot(x_ref[...], w_ref[...], preferred_element_type=jnp.float32)
        + b_ref[...]
    )


def _wide_kernel_ktiled_streamed(x_ref, w_ref, b_ref, o_ref):
    # K tiled, W streamed per K-slab; accumulate directly into the f32 output
    # (exact since o_ref is f32), bias folded into the k == 0 init.
    k = pl.program_id(1)

    @pl.when(k == 0)
    def _():
        o_ref[...] = jnp.broadcast_to(b_ref[...], o_ref.shape)

    o_ref[...] += jnp.dot(
        x_ref[...], w_ref[...], preferred_element_type=jnp.float32
    )


def _make_wide_kernel_ktiled_resident(tk: int):
    # K tiled, whole W resident in VMEM (constant index_map => single DMA);
    # the current K-slab is taken with an aligned in-kernel slice.
    def kernel(x_ref, w_ref, b_ref, o_ref):
        k = pl.program_id(1)

        @pl.when(k == 0)
        def _():
            o_ref[...] = jnp.broadcast_to(b_ref[...], o_ref.shape)

        start = pl.multiple_of(k * tk, 128)
        o_ref[...] += jnp.dot(
            x_ref[...],
            w_ref[pl.ds(start, tk), :],
            preferred_element_type=jnp.float32,
        )

    return kernel


# ----------------------------------------------------------------------------
# Tile planning
# ----------------------------------------------------------------------------
def _plan_tiles(M: int, E: int, O_pad: int) -> dict:
    """Pick (tm, tk) so the double-buffered working set fits _VMEM_BUDGET."""

    def working_set(tm, tk, w_rows):
        # 2x-buffered x tile + W + bias + output tile, all f32.
        return 4 * 2 * (tm * tk + w_rows * O_pad + O_pad + tm * O_pad)

    # M axis: <=512-row balanced tiles; force >=2 tiles when M is big enough
    # that a single tile would leave one v7x TensorCore idle.
    n_m_target = max(_cdiv(M, 512), 2 if M > 256 else 1)
    tm0, n_m0, M_pad0 = _balanced_tiles(M, n_m_target, 8)

    # Preferred: one whole-E K tile (no accumulator, no E padding, W resident).
    # Shrink tm (down to 128 rows) before resorting to K tiling.
    tm, n_m, M_pad = tm0, n_m0, M_pad0
    while True:
        if working_set(tm, E, E) <= _VMEM_BUDGET:
            return dict(tm=tm, n_m=n_m, M_pad=M_pad,
                        tk=E, n_k=1, E_pad=E, w_resident=True)
        if tm <= 128:
            break
        tm, n_m, M_pad = _balanced_tiles(M, n_m * 2, 8)

    # Large E and/or O: tile K (reduction axis last). Keep the whole W
    # resident in VMEM when it fits; otherwise stream W K-slabs too.
    tk, n_k, E_pad = _balanced_tiles(E, _cdiv(E, 512), 128)
    for w_resident, w_rows, tm_floor in ((True, E_pad, 128), (False, tk, 8)):
        tm, n_m, M_pad = tm0, n_m0, M_pad0
        while True:
            if working_set(tm, tk, w_rows) <= _VMEM_BUDGET:
                return dict(tm=tm, n_m=n_m, M_pad=M_pad,
                            tk=tk, n_k=n_k, E_pad=E_pad, w_resident=w_resident)
            if tm <= tm_floor:
                break
            tm, n_m, M_pad = _balanced_tiles(M, n_m * 2, 8)

    # Pathologically large O: smallest tiles, streamed W.
    return dict(tm=8, n_m=_cdiv(M, 8), M_pad=_round_up(M, 8),
                tk=tk, n_k=n_k, E_pad=E_pad, w_resident=False)


# ----------------------------------------------------------------------------
# Wrapper
# ----------------------------------------------------------------------------
def wide_layer(emb_inputs: jax.Array, weight_t: jax.Array, bias: jax.Array,
               *, _plan_override: dict | None = None) -> jax.Array:
    """Pallas WideLayer forward.

    Args:
      emb_inputs: (B, N, E)
      weight_t:   (E, O)  (transpose of torch nn.Linear weight (O, E))
      bias:       (O,)
      _plan_override: testing hook to force a tiling plan.
    Returns:
      (B, N, O), same dtype as emb_inputs.
    """
    B, N, E = emb_inputs.shape
    O = weight_t.shape[1]
    M = B * N
    out_dtype = emb_inputs.dtype

    # Lane-dense output: pad O up to a multiple of 128 (unmasked vst).
    # TODO(synk): for very small O (<=32) a transposed (O, M) output layout
    # would cut writeback bytes up to 16x; not done here to keep it simple.
    O_pad = _round_up(max(O, 1), 128)

    plan = _plan_override or _plan_tiles(M, E, O_pad)
    tm, n_m, M_pad = plan["tm"], plan["n_m"], plan["M_pad"]
    tk, n_k, E_pad = plan["tk"], plan["n_k"], plan["E_pad"]
    w_resident = plan["w_resident"]

    # ---- operands (compute in f32; zero padding is exact for the matmul) ---
    x2d = emb_inputs.reshape(M, E).astype(jnp.float32)
    if (M_pad, E_pad) != (M, E):
        x2d = jnp.pad(x2d, ((0, M_pad - M), (0, E_pad - E)))
    w = weight_t.astype(jnp.float32)
    if (E_pad, O_pad) != (E, O):
        w = jnp.pad(w, ((0, E_pad - E), (0, O_pad - O)))
    b2d = bias.astype(jnp.float32).reshape(1, O)
    if O_pad != O:
        b2d = jnp.pad(b2d, ((0, 0), (0, O_pad - O)))

    # ---- grid / specs -------------------------------------------------------
    if n_k == 1:
        kernel = _wide_kernel_whole_k
        grid = (n_m,)
        in_specs = [
            pl.BlockSpec((tm, E_pad), lambda i: (i, 0)),
            pl.BlockSpec((E_pad, O_pad), lambda i: (0, 0)),   # resident W
            pl.BlockSpec((1, O_pad), lambda i: (0, 0)),       # resident bias
        ]
        out_specs = pl.BlockSpec((tm, O_pad), lambda i: (i, 0))
        dim_sem = ("parallel",)
        w_reads = 1
    else:
        grid = (n_m, n_k)
        if w_resident:
            kernel = _make_wide_kernel_ktiled_resident(tk)
            w_spec = pl.BlockSpec((E_pad, O_pad), lambda i, k: (0, 0))
            w_reads = 1
        else:
            kernel = _wide_kernel_ktiled_streamed
            w_spec = pl.BlockSpec((tk, O_pad), lambda i, k: (k, 0))
            w_reads = n_m
        in_specs = [
            pl.BlockSpec((tm, tk), lambda i, k: (i, k)),
            w_spec,
            pl.BlockSpec((1, O_pad), lambda i, k: (0, 0)),
        ]
        out_specs = pl.BlockSpec((tm, O_pad), lambda i, k: (i, 0))
        dim_sem = ("parallel", "arbitrary")

    out2d = pl.pallas_call(
        kernel,
        out_shape=jax.ShapeDtypeStruct((M_pad, O_pad), jnp.float32),
        grid_spec=pltpu.PrefetchScalarGridSpec(
            num_scalar_prefetch=0,
            grid=grid,
            in_specs=in_specs,
            out_specs=out_specs,
        ),
        compiler_params=pltpu.CompilerParams(
            dimension_semantics=dim_sem,
            vmem_limit_bytes=_VMEM_LIMIT,
        ),
        cost_estimate=pl.CostEstimate(
            flops=2 * M_pad * E_pad * O_pad,
            transcendentals=0,
            bytes_accessed=4 * (M_pad * E_pad + w_reads * E_pad * O_pad
                                + M_pad * O_pad + O_pad),
        ),
    )(x2d, w, b2d)

    return out2d[:M, :O].astype(out_dtype).reshape(B, N, O)


# ----------------------------------------------------------------------------
# Demo / correctness checks
# ----------------------------------------------------------------------------
if __name__ == "__main__":
    def _ref(x, w, b):
        B_, N_, E_ = x.shape
        return (x.reshape(B_ * N_, E_) @ w + b).reshape(B_, N_, w.shape[1])

    # 1) Small demo shape (whole-E path, single grid point).
    B, N, E, O = 2, 8, 32, 16
    key = jax.random.PRNGKey(0)
    k_x, k_w, k_b = jax.random.split(key, 3)
    emb_inputs = jax.random.normal(k_x, (B, N, E), dtype=jnp.float32)
    bound = 1.0 / (E ** 0.5)
    weight_t = jax.random.uniform(k_w, (E, O), minval=-bound, maxval=bound,
                                  dtype=jnp.float32)
    bias = jax.random.uniform(k_b, (O,), minval=-bound, maxval=bound,
                              dtype=jnp.float32)
    out = jax.block_until_ready(wide_layer(emb_inputs, weight_t, bias))
    assert out.shape == (B, N, O)
    assert jnp.allclose(out, _ref(emb_inputs, weight_t, bias),
                        atol=1e-5, rtol=1e-5)

    # 2) Mid-size shape: multi-tile M (parallel axis), whole-E, O padding.
    B2, N2, E2, O2 = 8, 96, 640, 48
    kx2, kw2, kb2 = jax.random.split(jax.random.PRNGKey(1), 3)
    x2 = jax.random.normal(kx2, (B2, N2, E2), dtype=jnp.float32)
    w2 = jax.random.normal(kw2, (E2, O2), dtype=jnp.float32) * 0.02
    b2 = jax.random.normal(kb2, (O2,), dtype=jnp.float32) * 0.02
    out2 = jax.block_until_ready(wide_layer(x2, w2, b2))
    assert jnp.allclose(out2, _ref(x2, w2, b2), atol=1e-3, rtol=1e-4)

    # 3) Very large E: exercises the K-tiled path with W resident in VMEM.
    B3, N3, E3, O3 = 2, 128, 16384, 24
    kx3, kw3, kb3 = jax.random.split(jax.random.PRNGKey(2), 3)
    x3 = jax.random.normal(kx3, (B3, N3, E3), dtype=jnp.float32)
    w3 = jax.random.normal(kw3, (E3, O3), dtype=jnp.float32) * 0.01
    b3 = jax.random.normal(kb3, (O3,), dtype=jnp.float32) * 0.01
    out3 = jax.block_until_ready(wide_layer(x3, w3, b3))
    assert jnp.allclose(out3, _ref(x3, w3, b3), atol=3e-3, rtol=3e-4)

    # 4) Forced streamed-W K-tiled plan (testing hook) on a modest shape.
    B4, N4, E4, O4 = 2, 192, 640, 48
    kx4, kw4, kb4 = jax.random.split(jax.random.PRNGKey(3), 3)
    x4 = jax.random.normal(kx4, (B4, N4, E4), dtype=jnp.float32)
    w4 = jax.random.normal(kw4, (E4, O4), dtype=jnp.float32) * 0.02
    b4 = jax.random.normal(kb4, (O4,), dtype=jnp.float32) * 0.02
    forced = dict(tm=192, n_m=2, M_pad=384, tk=384, n_k=2, E_pad=768,
                  w_resident=False)
    out4 = jax.block_until_ready(wide_layer(x4, w4, b4, _plan_override=forced))
    assert jnp.allclose(out4, _ref(x4, w4, b4), atol=1e-3, rtol=1e-4)

    print("KERNEL_OK")
</pallas_src>

<mosaic_0001>
module attributes {stable_mosaic.version = 11 : i64} {
  func.func @_wide_kernel_whole_k(%arg0: i32, %arg1: memref<16x32xf32, #tpu.memory_space<vmem>>, %arg2: memref<32x128xf32, #tpu.memory_space<vmem>>, %arg3: memref<1x128xf32, #tpu.memory_space<vmem>>, %arg4: memref<16x128xf32, #tpu.memory_space<vmem>>) attributes {dimension_semantics = [#tpu.dimension_semantics<parallel>], iteration_bounds = array<i64: 1>, scalar_prefetch = 0 : i64, scratch_operands = 0 : i64, tpu.core_type = #tpu.core_type<tc>, window_params = [{transform_indices = @transform_0, window_bounds = array<i64: 16, 32>}, {pipeline_mode = #tpu.pipeline_mode<synchronous>, transform_indices = @transform_1, window_bounds = array<i64: 32, 128>}, {pipeline_mode = #tpu.pipeline_mode<synchronous>, transform_indices = @transform_2, window_bounds = array<i64: 1, 128>}, {transform_indices = @transform_3, window_bounds = array<i64: 16, 128>}]} {
    %c0 = arith.constant 0 : index
    %c0_0 = arith.constant 0 : index
    %0 = vector.load %arg1[%c0, %c0_0] : memref<16x32xf32, #tpu.memory_space<vmem>>, vector<16x32xf32>
    %c0_1 = arith.constant 0 : index
    %c0_2 = arith.constant 0 : index
    %1 = vector.load %arg2[%c0_1, %c0_2] : memref<32x128xf32, #tpu.memory_space<vmem>>, vector<32x128xf32>
    %cst = arith.constant dense<0.000000e+00> : vector<16x128xf32>
    %2 = tpu.matmul %0, %1, %cst {dimension_numbers = #tpu.dot_dimension_numbers<[1], [0], [0], [1], [0, 0, 1, 1], [], []>} : vector<16x32xf32>, vector<32x128xf32>, vector<16x128xf32> -> vector<16x128xf32>
    %c0_3 = arith.constant 0 : index
    %c0_4 = arith.constant 0 : index
    %3 = vector.load %arg3[%c0_3, %c0_4] : memref<1x128xf32, #tpu.memory_space<vmem>>, vector<1x128xf32>
    %4 = vector.broadcast %3 : vector<1x128xf32> to vector<16x128xf32>
    %5 = arith.addf %2, %4 : vector<16x128xf32>
    %c0_5 = arith.constant 0 : index
    %c0_6 = arith.constant 0 : index
    %6 = vector.load %arg4[%c0_5, %c0_6] : memref<16x128xf32, #tpu.memory_space<vmem>>, vector<16x128xf32>
    tpu.vector_store %arg4[%c0_5, %c0_6], %5 {strides = array<i32>} : memref<16x128xf32, #tpu.memory_space<vmem>>, vector<16x128xf32>,
    return
  }
  func.func @transform_0(%arg0: i32) -> (i32, i32) {
    %c0_i32 = arith.constant 0 : i32
    %c0_i32_0 = arith.constant 0 : i32
    return %arg0, %c0_i32 : i32, i32
  }
  func.func @transform_1(%arg0: i32) -> (i32, i32) {
    %c0_i32 = arith.constant 0 : i32
    %c0_i32_0 = arith.constant 0 : i32
    %c0_i32_1 = arith.constant 0 : i32
    return %c0_i32, %c0_i32_0 : i32, i32
  }
  func.func @transform_2(%arg0: i32) -> (i32, i32) {
    %c0_i32 = arith.constant 0 : i32
    %c0_i32_0 = arith.constant 0 : i32
    %c0_i32_1 = arith.constant 0 : i32
    return %c0_i32, %c0_i32_0 : i32, i32
  }
  func.func @transform_3(%arg0: i32) -> (i32, i32) {
    %c0_i32 = arith.constant 0 : i32
    %c0_i32_0 = arith.constant 0 : i32
    return %arg0, %c0_i32 : i32, i32
  }
}

</mosaic_0001>

<llo_original>
// kernel: tpu_custom_call.1
$region0: #{tpu_custom_call.1}
  #allocation0 [shape = 'u32[]', space=smem, size = 0x4, offset = 0x4, fixed_abs, tag = 'smem constant byte address 0x4 - core index']
  #allocation1 [shape = 'u32[144,128]{1,0:T(1,128)}', space=vmem, size = 0x12000, scoped, tag = 'internal scratch']
  %s0 = inlined_call_operand.hbm [shape: f32[16,32], index: 0, kind: input, shape index: {}]
  %s1 = inlined_call_operand.hbm [shape: f32[32,128], index: 1, kind: input, shape index: {}]
  %s2 = inlined_call_operand.vmem [shape: f32[1,128], index: 2, kind: input, shape index: {}]
  %s3 = inlined_call_operand.hbm [shape: f32[16,128], index: 3, kind: output, shape index: {}]
  %s4 = sld [smem:[#allocation0]]
  $region30: #{tpu_custom_call.1} parent=0
    _
  %s6 = ssub.s32 1, %s4
  %s7 = scalar_select 0, %s6, %s4
  $region1: #{tpu_custom_call.1} parent=0
    #allocation2 [shape = 'u8[8192]{0}', space=vmem, size = 0x2000, scoped, tag = 'input window, operand 0, single buffered']
    #allocation3 [shape = 's32[1]{0}', space=sflag, size = 0x4, scoped, tag = 'scoped memory for tpu_custom_call.1']
    #allocation4 [shape = 's32[1]{0}', space=sflag, size = 0x4, scoped, tag = 'scoped memory for tpu_custom_call.1']
    #allocation5 [shape = 'u8[16384]{0}', space=vmem, size = 0x4000, scoped, tag = 'input window, operand 1, single buffered']
    #allocation6 [shape = 's32[1]{0}', space=sflag, size = 0x4, scoped, tag = 'scoped memory for tpu_custom_call.1']
    #allocation7 [shape = 'u8[8192]{0}', space=vmem, size = 0x2000, scoped, tag = 'output window, operand 0, single buffered']
    %8 = vsyncpa [#allocation3], 0
    %9 = vsyncpa [#allocation6], 0
    %10 = vsyncpa [#allocation4], 0
    // Predicated region
    $region2: #{tpu_custom_call.1} parent=1 // pred_check
      _
    $region3: #{tpu_custom_call.1} parent=1 // pred_check_branch
      %12 = sbr.rel (0) target = $region5
    $region4: #{tpu_custom_call.1} parent=1 // pred_region
      %s14 = ssub.s32 256, 256
      %15 = vsyncadd [#allocation3], %s14
      %s16 = sshll.u32 [#allocation2], 4
      %s17 = int_to_ptr.vmem [resolvable:$true] %s16
      %22 = dma.hbm_to_vmem [thread:$0]  %s0, 256, %s17, [#allocation3], 128, 128, 8
    $region5: #{tpu_custom_call.1} parent=1 // pred_fallthru
      _
    // Predicated region
    $region6: #{tpu_custom_call.1} parent=1 // pred_check
      _
    $region7: #{tpu_custom_call.1} parent=1 // pred_check_branch
      %24 = sbr.rel (0) target = $region9
    $region8: #{tpu_custom_call.1} parent=1 // pred_region
      %s26 = ssub.s32 512, 512
      %27 = vsyncadd [#allocation6], %s26
      %s28 = sshll.u32 [#allocation5], 4
      %s29 = int_to_ptr.vmem [resolvable:$true] %s28
      %34 = dma.hbm_to_vmem [thread:$0]  %s1, 512, %s29, [#allocation6], 128, 128, 8
    $region9: #{tpu_custom_call.1} parent=1 // pred_fallthru
      _
    // Predicated region
    $region10: #{tpu_custom_call.1} parent=1 // pred_check
      _
    $region11: #{tpu_custom_call.1} parent=1 // pred_check_branch
      %36 = sbr.rel (0) target = $region13
    $region12: #{tpu_custom_call.1} parent=1 // pred_region
      _
    $region13: #{tpu_custom_call.1} parent=1 // pred_fallthru
      _
    // Predicated region
    $region14: #{tpu_custom_call.1} parent=1 // pred_check
      _
    $region15: #{tpu_custom_call.1} parent=1 // pred_check_branch
      %38 = sbr.rel (0) target = $region17
    $region16: #{tpu_custom_call.1} parent=1 // pred_region
      %39 = dma.done [#allocation3], 256
    $region17: #{tpu_custom_call.1} parent=1 // pred_fallthru
      _
    // Predicated region
    $region18: #{tpu_custom_call.1} parent=1 // pred_check
      _
    $region19: #{tpu_custom_call.1} parent=1 // pred_check_branch
      %41 = sbr.rel (0) target = $region21
    $region20: #{tpu_custom_call.1} parent=1 // pred_region
      %42 = dma.done [#allocation6], 512
    $region21: #{tpu_custom_call.1} parent=1 // pred_fallthru
      _
    %v43 = vld [vmem:[#allocation2] sm:$0xff]
    %v44 = vld [vmem:[#allocation2 + $0x8] sm:$0xff]
    %v45 = vld [vmem:[#allocation5] sm:$0xff]
    %v46 = vld [vmem:[#allocation5 + $0x8] sm:$0xff]
    %v47 = vld [vmem:[#allocation5 + $0x10] sm:$0xff]
    %v48 = vld [vmem:[#allocation5 + $0x18] sm:$0xff]
    %v49 = vld [vmem:[%s2] sm:$0x1]
    %v51 = vlaneseq
    %v52 = vshrl.u32 %v51, 7
    %v53 = vsub.s32 0, %v52
    %v54 = vrot.slane %v49, %v53
    %vm56 = vcmask 261120
    %v58 = vsel %vm56, %v43, 0
    %v61 = vsel %vm56, %v44, 0
    %63 = vmatprep.subr.mxu0 0.0
    %64 = vmatpush1.msra.mxu0 %v45
    %65 = vmatprep.subr.mxu0 0.0
    %66 = vmatpush1.msra.mxu0 %v46
    %67 = vmatprep.subr.mxu0 0.0
    %68 = vmatpush1.msra.mxu0 %v47
    %69 = vmatprep.subr.mxu0 0.0
    %70 = vmatpush1.msra.mxu0 %v48
    %71 = vmatprep.subr.mxu0 0.0
    %72 = vmatpush1.msra.mxu0 0.0
    %73 = vmatprep.subr.mxu0 0.0
    %74 = vmatpush1.msra.mxu0 0.0
    %75 = vmatprep.subr.mxu0 0.0
    %76 = vmatpush1.msra.mxu0 0.0
    %77 = vmatprep.subr.mxu0 0.0
    %78 = vmatpush1.msra.mxu0 0.0
    %79 = vmatprep.subr.mxu0 0.0
    %80 = vmatpush1.msra.mxu0 0.0
    %81 = vmatprep.subr.mxu0 0.0
    %82 = vmatpush1.msra.mxu0 0.0
    %83 = vmatprep.subr.mxu0 0.0
    %84 = vmatpush1.msra.mxu0 0.0
    %85 = vmatprep.subr.mxu0 0.0
    %86 = vmatpush1.msra.mxu0 0.0
    %87 = vmatprep.subr.mxu0 0.0
    %88 = vmatpush1.msra.mxu0 0.0
    %89 = vmatprep.subr.mxu0 0.0
    %90 = vmatpush1.msra.mxu0 0.0
    %91 = vmatprep.subr.mxu0 0.0
    %92 = vmatpush1.msra.mxu0 0.0
    %93 = vmatprep.subr.mxu0 0.0
    %94 = vmatpush1.msra.mxu0 0.0
    %95 = vmatprep.subr.mxu0 0.0
    %96 = vmatpush1.msra.mxu0 0.0
    %97 = vmatprep.subr.mxu0 0.0
    %98 = vmatpush1.msra.mxu0 0.0
    %99 = vmatprep.subr.mxu0 0.0
    %100 = vmatpush1.msra.mxu0 0.0
    %101 = vmatprep.subr.mxu0 0.0
    %102 = vmatpush1.msra.mxu0 0.0
    %103 = vmatprep.subr.mxu0 0.0
    %104 = vmatpush1.msra.mxu0 0.0
    %105 = vmatprep.subr.mxu0 0.0
    %106 = vmatpush1.msra.mxu0 0.0
    %107 = vmatprep.subr.mxu0 0.0
    %108 = vmatpush1.msra.mxu0 0.0
    %109 = vmatprep.subr.mxu0 0.0
    %110 = vmatpush1.msra.mxu0 0.0
    %111 = vmatprep.subr.mxu0 0.0
    %112 = vmatpush1.msra.mxu0 0.0
    %113 = vmatprep.subr.mxu0 0.0
    %114 = vmatpush1.msra.mxu0 0.0
    %115 = vmatprep.subr.mxu0 0.0
    %116 = vmatpush1.msra.mxu0 0.0
    %117 = vmatprep.subr.mxu0 0.0
    %118 = vmatpush1.msra.mxu0 0.0
    %119 = vmatprep.subr.mxu0 0.0
    %120 = vmatpush1.msra.mxu0 0.0
    %121 = vmatprep.subr.mxu0 0.0
    %122 = vmatpush1.msra.mxu0 0.0
    %123 = vmatprep.subr.mxu0 0.0
    %124 = vmatpush1.msra.mxu0 0.0
    %125 = vmatprep.subr.mxu0 0.0
    %126 = vmatpush1.msra.mxu0 0.0
    %127 = vmatprep.mubr.f32.mxu0 0.0
    %128 = vmatmul.mubr.f32.gmra.mrb[0].mxu0 %v58
    %v129 = vpop.f32.mrb[0].mxu0
    %v130 = vadd.f32 %v54, %v129
    %v131 = vpop.f32.mrb[0].mxu0
    %132 = vmatprep.mubr.f32.mxu0 0.0
    %133 = vmatmul.mubr.f32.gmra.mrb[0].mxu0 %v61
    %v134 = vpop.f32.mrb[0].mxu0
    %v135 = vadd.f32 %v54, %v134
    %v136 = vpop.f32.mrb[0].mxu0
    %137 = vdwg.mxu0
    %138 = vst [vmem:[#allocation7] sm:$0xff] %v130
    %139 = vst [vmem:[#allocation7 + $0x8] sm:$0xff] %v135
    // Predicated region
    $region22: #{tpu_custom_call.1} parent=1 // pred_check
      _
    $region23: #{tpu_custom_call.1} parent=1 // pred_check_branch
      %141 = sbr.rel (0) target = $region25
    $region24: #{tpu_custom_call.1} parent=1 // pred_region
      %s143 = ssub.s32 256, 256
      %144 = vsyncadd [#allocation4], %s143
      %s145 = sshll.u32 [#allocation7], 4
      %s146 = int_to_ptr.vmem [resolvable:$true] %s145
      %151 = dma.vmem_to_hbm [thread:$0]  %s146, 256, %s3, [#allocation4], 128, 128, 8
    $region25: #{tpu_custom_call.1} parent=1 // pred_fallthru
      _
    // Predicated region
    $region26: #{tpu_custom_call.1} parent=1 // pred_check
      _
    $region27: #{tpu_custom_call.1} parent=1 // pred_check_branch
      %153 = sbr.rel (0) target = $region29
    $region28: #{tpu_custom_call.1} parent=1 // pred_region
      %154 = dma.done [#allocation4], 256
    $region29: #{tpu_custom_call.1} parent=1 // pred_fallthru
      _
    %155 = vsyncpa [#allocation3], 1
    %156 = vsyncpa [#allocation6], 1
    %157 = vsyncpa [#allocation4], 1

</llo_original>
